<compile_context>
chip_gen: v5e
topology: v5e:2x2
jax: 0.10.0
libtpu: 0.0.40
codegen_flags: <defaults>
</compile_context>

<pallas_src>
import functools
import math

import jax
import jax.numpy as jnp
import numpy as np
from jax.experimental import pallas as pl
from jax.experimental.pallas import tpu as pltpu

LANE = 128
HEAD_PAD = 8                       # head axis padded to one sublane group
_VMEM_LIMIT = 32 * 1024 * 1024
_NEG_INF = -1e30


def _round_up(x, m):
    return ((x + m - 1) // m) * m


def _pad_to(a, shape):
    pads = [(0, s - d) for d, s in zip(a.shape, shape)]
    return jnp.pad(a, pads)


# ----------------------------- tiled linear ---------------------------------

def _linear_kernel(x_ref, w_ref, b_ref, o_ref, acc_ref):
    @pl.when(pl.program_id(2) == 0)
    def _():
        acc_ref[...] = jnp.zeros_like(acc_ref)

    acc_ref[...] += jnp.dot(x_ref[...], w_ref[...],
                            preferred_element_type=jnp.float32)

    @pl.when(pl.program_id(2) == pl.num_programs(2) - 1)
    def _():
        o_ref[...] = (acc_ref[...] + b_ref[...]).astype(o_ref.dtype)


def linear(x, w, b=None, out_dtype=jnp.float32):
    """y = x @ w + b, tiled over (M, N, K); bf16 MXU inputs, f32 accumulation."""
    M, K = x.shape
    Kw, N = w.shape
    assert K == Kw
    Kp, Np = _round_up(K, LANE), _round_up(N, LANE)
    tk, tn = math.gcd(Kp, 512), math.gcd(Np, 512)
    tm = min(512, _round_up(M, 8))
    Mp = _round_up(M, tm)
    xp = _pad_to(x.astype(jnp.bfloat16), (Mp, Kp))
    wp = _pad_to(w.astype(jnp.bfloat16), (Kp, Np))
    if b is None:
        bp = jnp.zeros((1, Np), jnp.float32)
    else:
        bp = _pad_to(b.astype(jnp.float32).reshape(1, -1), (1, Np))
    out = pl.pallas_call(
        _linear_kernel,
        out_shape=jax.ShapeDtypeStruct((Mp, Np), out_dtype),
        grid_spec=pltpu.PrefetchScalarGridSpec(
            num_scalar_prefetch=0,
            grid=(Mp // tm, Np // tn, Kp // tk),
            in_specs=[pl.BlockSpec((tm, tk), lambda i, j, k: (i, k)),
                      pl.BlockSpec((tk, tn), lambda i, j, k: (k, j)),
                      pl.BlockSpec((1, tn), lambda i, j, k: (0, j))],
            out_specs=pl.BlockSpec((tm, tn), lambda i, j, k: (i, j)),
            scratch_shapes=[pltpu.VMEM((tm, tn), jnp.float32)]),
        compiler_params=pltpu.CompilerParams(
            dimension_semantics=("parallel", "parallel", "arbitrary"),
            vmem_limit_bytes=_VMEM_LIMIT),
    )(xp, wp, bp)
    return out[:M, :N]


# --------------- fused edge-logit + segment-softmax aggregation ---------------

def _hgn_attn_kernel(num_heads, neg_slope, apply_elu,
                     start_ref, nblk_ref,                       # scalar prefetch (SMEM)
                     dst_ref, hs_ref, re_ref, alT_ref, aeT_ref, gT_ref,
                     res_ref, hm_ref,
                     o_ref, m_scr, l_scr, acc_scr):
    i = pl.program_id(0)
    j = pl.program_id(1)
    tn, _ = o_ref.shape
    te = dst_ref.shape[1]

    @pl.when(j == 0)
    def _():
        m_scr[...] = jnp.full_like(m_scr, _NEG_INF)
        l_scr[...] = jnp.zeros_like(l_scr)
        acc_scr[...] = jnp.zeros_like(acc_scr)

    @pl.when(j < nblk_ref[i])                                   # skip non-intersecting blocks
    def _():
        local = dst_ref[...] - i * tn                           # [1, te] (padding dst = -1)
        rows = jax.lax.broadcasted_iota(jnp.int32, (tn, te), 0)
        mask = rows == local                                    # [tn, te] one-hot incidence
        mask_f = mask.astype(jnp.float32)
        valid = jnp.logical_and(local >= 0, local < tn)         # [1, te]

        hs = hs_ref[...]                                        # [te, HCp] bf16
        # Fused per-edge attention logits for ALL heads, heads on sublanes.
        nt_dims = (((1,), (1,)), ((), ()))                      # contract feature dim (q @ k.T style)
        lg = jax.lax.dot_general(alT_ref[...], hs, nt_dims,
                                 preferred_element_type=jnp.float32)
        lg += jax.lax.dot_general(aeT_ref[...], re_ref[...], nt_dims,
                                  preferred_element_type=jnp.float32)
        # Destination-node term gathered onto edges with a one-hot matmul.
        lg += jnp.dot(gT_ref[...], mask_f, preferred_element_type=jnp.float32)
        a = jnp.where(lg > 0, lg, neg_slope * lg)               # LeakyReLU
        a = jnp.where(valid, a, _NEG_INF)                       # [HEAD_PAD, te]

        alphas, slabs = [], []
        for h in range(num_heads):                              # static, small
            a_row = a[h:h + 1, :]                               # [1, te]
            masked = jnp.where(mask, a_row, _NEG_INF)           # [tn, te]
            m_blk = jnp.max(masked, axis=1, keepdims=True)      # [tn, 1]
            m_old = m_scr[h]
            m_new = jnp.maximum(m_old, m_blk)
            # per-edge running max of its destination node: [1, te]
            m_edge = jnp.max(jnp.where(mask, m_new, _NEG_INF), axis=0, keepdims=True)
            pe = jnp.exp(a_row - m_edge)                        # exp over te elems only
            alphas.append(jnp.exp(m_old - m_new))               # [tn, 1]
            slabs.append((mask_f * pe).astype(jnp.bfloat16))    # [tn, te]
            m_scr[h] = m_new

        p = jnp.concatenate(slabs, axis=0)                      # [H*tn, te] bf16
        alpha = jnp.concatenate(alphas, axis=0)                 # [H*tn, 1]
        ones = jnp.ones((te, 1), jnp.bfloat16)
        l_blk = jnp.dot(p, ones, preferred_element_type=jnp.float32)   # softmax denom pieces
        for h in range(num_heads):
            l_scr[h] = alphas[h] * l_scr[h] + l_blk[h * tn:(h + 1) * tn]
        # single merged MXU call for all heads
        acc_scr[...] = alpha * acc_scr[...] + jnp.dot(
            p, hs, preferred_element_type=jnp.float32)

    @pl.when(j == pl.num_programs(1) - 1)
    def _():
        out = res_ref[...]                                      # fused node residual
        for h in range(num_heads):
            l_h = l_scr[h]
            inv = 1.0 / jnp.where(l_h == 0.0, 1.0, l_h)         # isolated nodes
            out = out + acc_scr[h * tn:(h + 1) * tn, :] * hm_ref[h:h + 1, :] * inv
        if apply_elu:                                           # fused ELU between layers
            out = jnp.where(out > 0, out, jnp.expm1(out))
        o_ref[...] = out


def hgn_attention(dst_p, h_src, r_edge, A_lT, A_eT, gT, res_p, head_mask,
                  start_blk, nblk, *, num_heads, neg_slope, apply_elu,
                  tn, te, max_blocks):
    N_pad, HCp = res_p.shape
    DEp = r_edge.shape[1]
    HS = A_lT.shape[0]
    nb = N_pad // tn

    def eb(i, j, start_ref, nblk_ref):
        # clamp so skipped iterations keep the same edge-block index -> no extra DMA
        last = jnp.maximum(nblk_ref[i] - 1, 0)
        return start_ref[i] + jnp.minimum(j, last)

    kern = functools.partial(_hgn_attn_kernel, num_heads, neg_slope, apply_elu)
    return pl.pallas_call(
        kern,
        out_shape=jax.ShapeDtypeStruct((N_pad, HCp), jnp.float32),
        grid_spec=pltpu.PrefetchScalarGridSpec(
            num_scalar_prefetch=2,
            grid=(nb, max_blocks),
            in_specs=[
                pl.BlockSpec((1, te), lambda i, j, s, n: (0, eb(i, j, s, n))),    # dst
                pl.BlockSpec((te, HCp), lambda i, j, s, n: (eb(i, j, s, n), 0)),  # h_src
                pl.BlockSpec((te, DEp), lambda i, j, s, n: (eb(i, j, s, n), 0)),  # r_edge
                pl.BlockSpec((HS, HCp), lambda i, j, s, n: (0, 0)),               # A_l^T
                pl.BlockSpec((HS, DEp), lambda i, j, s, n: (0, 0)),               # A_e^T
                pl.BlockSpec((HS, tn), lambda i, j, s, n: (0, i)),                # g^T (dest term)
                pl.BlockSpec((tn, HCp), lambda i, j, s, n: (i, 0)),               # residual
                pl.BlockSpec((HS, HCp), lambda i, j, s, n: (0, 0)),               # head mask
            ],
            out_specs=pl.BlockSpec((tn, HCp), lambda i, j, s, n: (i, 0)),
            scratch_shapes=[pltpu.VMEM((num_heads, tn, 1), jnp.float32),
                            pltpu.VMEM((num_heads, tn, 1), jnp.float32),
                            pltpu.VMEM((num_heads * tn, HCp), jnp.float32)]),
        compiler_params=pltpu.CompilerParams(
            dimension_semantics=("parallel", "arbitrary"),
            vmem_limit_bytes=_VMEM_LIMIT),
    )(start_blk, nblk, dst_p, h_src, r_edge, A_lT, A_eT, gT, res_p, head_mask)


# ---------------------- host-side graph structure (numpy) ---------------------

def build_edge_structure(edge_index_np, edge_type_np, num_nodes):
    """Host (dataloader-style) preprocessing: sort edges by destination once and
    compute per-node-block CSR edge-block ranges, so the Pallas grid is static
    and tight."""
    E = int(edge_index_np.shape[1])
    te = min(1024, _round_up(max(E, 1), LANE))
    E_pad = _round_up(max(E, 1), te)
    neb = E_pad // te
    if num_nodes >= 512:
        tn = 256
    elif num_nodes >= 256:
        tn = 128                       # keep >= 2 node blocks for v7x megacore
    else:
        tn = _round_up(num_nodes, 8)   # tiny graph: single node block
    N_pad = _round_up(num_nodes, tn)
    nb = N_pad // tn

    perm = np.argsort(edge_index_np[1], kind="stable")
    src_s = edge_index_np[0][perm].astype(np.int32)
    dst_s = edge_index_np[1][perm].astype(np.int32)
    et_s = edge_type_np[perm].astype(np.int32)

    src_pad = np.zeros(E_pad, np.int32)
    src_pad[:E] = src_s
    et_pad = np.zeros(E_pad, np.int32)
    et_pad[:E] = et_s
    dst_pad = np.full(E_pad, -1, np.int32)
    dst_pad[:E] = dst_s

    starts = np.arange(nb, dtype=np.int64) * tn
    e_lo = np.searchsorted(dst_s, starts, side="left")
    e_hi = np.searchsorted(dst_s, starts + tn, side="left")
    start_blk = (e_lo // te).astype(np.int32)
    end_blk = ((e_hi + te - 1) // te).astype(np.int32)
    nblk = np.where(e_hi > e_lo, end_blk - start_blk, 0).astype(np.int32)
    start_blk = np.clip(start_blk, 0, neb - 1).astype(np.int32)
    max_blocks = max(int(nblk.max()) if nb > 0 else 0, 1)

    return dict(
        E=E, E_pad=E_pad, te=te, tn=tn, N_pad=N_pad, nb=nb, max_blocks=max_blocks,
        perm=jnp.asarray(perm.astype(np.int32)),
        src_pad=jnp.asarray(src_pad),
        etype_pad=jnp.asarray(et_pad),
        dst_pad=jnp.asarray(dst_pad.reshape(1, E_pad)),
        start_blk=jnp.asarray(start_blk),
        nblk=jnp.asarray(nblk),
    )


# ----------------------------- SimpleHGNConv ---------------------------------

def simple_hgn_conv(cp, h, es, eattr_pad, num_nodes, num_heads,
                    negative_slope, apply_elu):
    HCp = cp['W'].shape[1]                                      # 128-padded H*C

    hw = linear(h, cp['W'], out_dtype=jnp.bfloat16)             # [N, HCp] bf16, lane-dense
    if 'res' in cp:
        res = linear(h, cp['res'])                              # [N, HCp] f32
    else:
        res = jnp.zeros((num_nodes, HCp), jnp.float32)

    # Tiny XLA glue: relation features per edge type, gathered onto padded edges.
    r_table = jnp.dot(cp['edge_type_emb'], cp['W_r'],
                      preferred_element_type=jnp.float32)       # [T, DEp]
    r_edge = jnp.take(r_table, es['etype_pad'], axis=0)         # [E_pad, DEp]
    if eattr_pad is not None and 'W_e' in cp:
        r_edge = r_edge + linear(eattr_pad, cp['W_e'])
    r_edge = r_edge.astype(jnp.bfloat16)

    # Padded source indices -> gather comes out already [E_pad, HCp] (no pad copy).
    # TODO(synk): fuse this row gather into the attention kernel DMA pipeline.
    h_src = jnp.take(hw, es['src_pad'], axis=0)

    # Per-destination-node attention term (replaces the old per-edge h_dst gather).
    g = jnp.dot(hw, cp['A_r'].astype(jnp.bfloat16),
                preferred_element_type=jnp.float32)             # [N, HEAD_PAD]
    gT = jnp.pad(g.T, ((0, 0), (0, es['N_pad'] - num_nodes)))   # [HEAD_PAD, N_pad]
    res_p = jnp.pad(res, ((0, es['N_pad'] - num_nodes), (0, 0)))

    out = hgn_attention(es['dst_pad'], h_src, r_edge,
                        cp['A_lT'].astype(jnp.bfloat16),
                        cp['A_eT'].astype(jnp.bfloat16),
                        gT, res_p, cp['head_mask'],
                        es['start_blk'], es['nblk'],
                        num_heads=num_heads, neg_slope=negative_slope,
                        apply_elu=apply_elu, tn=es['tn'], te=es['te'],
                        max_blocks=es['max_blocks'])
    return out[:num_nodes]


# ----------------------------- SimpleHGN model --------------------------------

def _dense_init(key, shape, scale=0.1):
    return scale * jax.random.normal(key, shape, dtype=jnp.float32)


def init_simple_hgn_params(key, node_feat_dims, edge_feat_dims, node_hid,
                           edge_hid, edge_type_dim, node_out, num_layers,
                           num_heads, use_residual=True):
    assert num_heads <= HEAD_PAD
    nh_p = _round_up(node_hid, LANE)
    eh_p = _round_up(edge_hid, LANE)
    hc = node_hid * num_heads
    hc_p = _round_up(hc, LANE)
    de = edge_type_dim * num_heads
    de_p = _round_up(de, LANE)
    et_p = _round_up(edge_type_dim, LANE)
    no_p = _round_up(node_out, LANE)

    params = {'node_lin': {}, 'edge_lin': {}, 'convs': []}
    keys = iter(jax.random.split(key, 512))

    for nt, d in node_feat_dims.items():
        params['node_lin'][nt] = {
            'w': _pad_to(_dense_init(next(keys), (d, node_hid)), (d, nh_p)),
            'b': _pad_to(_dense_init(next(keys), (node_hid,)), (nh_p,))}
    for et, d in edge_feat_dims.items():
        if d:
            params['edge_lin'][et] = {
                'w': _pad_to(_dense_init(next(keys), (d, edge_hid)), (d, eh_p)),
                'b': _pad_to(_dense_init(next(keys), (edge_hid,)), (eh_p,))}

    num_edge_types = len(edge_feat_dims)
    has_edge_feat = any(edge_feat_dims.values())
    for layer_id in range(num_layers):
        in_dim = node_hid if layer_id == 0 else hc
        in_p = nh_p if layer_id == 0 else hc_p
        a_l = _dense_init(next(keys), (num_heads, node_hid))
        a_r = _dense_init(next(keys), (num_heads, node_hid))
        a_e = _dense_init(next(keys), (num_heads, edge_type_dim))
        A_lT = jnp.zeros((HEAD_PAD, hc_p), jnp.float32)
        A_eT = jnp.zeros((HEAD_PAD, de_p), jnp.float32)
        A_r = jnp.zeros((hc_p, HEAD_PAD), jnp.float32)
        hm = jnp.zeros((HEAD_PAD, hc_p), jnp.float32)
        for h in range(num_heads):
            A_lT = A_lT.at[h, h * node_hid:(h + 1) * node_hid].set(a_l[h])
            A_eT = A_eT.at[h, h * edge_type_dim:(h + 1) * edge_type_dim].set(a_e[h])
            A_r = A_r.at[h * node_hid:(h + 1) * node_hid, h].set(a_r[h])
            hm = hm.at[h, h * node_hid:(h + 1) * node_hid].set(1.0)
        conv = {
            'W': _pad_to(_dense_init(next(keys), (in_dim, hc)), (in_p, hc_p)),
            'edge_type_emb': _pad_to(
                _dense_init(next(keys), (num_edge_types, edge_type_dim)),
                (num_edge_types, et_p)),
            'W_r': _pad_to(_dense_init(next(keys), (edge_type_dim, de)),
                           (et_p, de_p)),
            'A_lT': A_lT, 'A_eT': A_eT, 'A_r': A_r, 'head_mask': hm,
        }
        if has_edge_feat:
            conv['W_e'] = _pad_to(_dense_init(next(keys), (edge_hid, de)),
                                  (eh_p, de_p))
        if use_residual:
            conv['res'] = _pad_to(_dense_init(next(keys), (in_dim, hc)),
                                  (in_p, hc_p))
        params['convs'].append(conv)
    params['lin'] = {
        'w': _pad_to(_dense_init(next(keys), (hc, node_out)), (hc_p, no_p)),
        'b': _pad_to(_dense_init(next(keys), (node_out,)), (no_p,))}
    return params


def simple_hgn_forward(params, x_dict, edge_index_dict, edge_attr_dict,
                       num_heads, num_layers, node_out_dim,
                       negative_slope=0.2):
    node_types = list(x_dict.keys())
    # 1) per-node-type input projection (tiled Pallas matmul)
    proj = {nt: linear(x_dict[nt], params['node_lin'][nt]['w'],
                       params['node_lin'][nt]['b']) for nt in node_types}
    # 2) to_homogeneous: concat node features, build offsets
    offsets, counts, off = {}, {}, 0
    for nt in node_types:
        offsets[nt] = off
        counts[nt] = proj[nt].shape[0]
        off += counts[nt]
    num_nodes = off
    h = jnp.concatenate([proj[nt] for nt in node_types], axis=0)   # [N, 128-padded]

    # 3) host-side edge bookkeeping (dataloader territory in a real pipeline)
    ei_np, et_np, ea_list = [], [], []
    for t, etype in enumerate(edge_index_dict.keys()):
        src_t, _, dst_t = etype
        ei = np.asarray(jax.device_get(edge_index_dict[etype]))
        ei_np.append(np.stack([ei[0] + offsets[src_t], ei[1] + offsets[dst_t]]))
        et_np.append(np.full((ei.shape[1],), t, dtype=np.int32))
        if etype in params['edge_lin']:
            ea_list.append(linear(edge_attr_dict[etype],
                                  params['edge_lin'][etype]['w'],
                                  params['edge_lin'][etype]['b']))
    edge_index_np = np.concatenate(ei_np, axis=1)
    edge_type_np = np.concatenate(et_np, axis=0)
    es = build_edge_structure(edge_index_np, edge_type_np, num_nodes)

    eattr_pad = None
    if ea_list:
        eattr = jnp.concatenate(ea_list, axis=0)
        eattr = jnp.take(eattr, es['perm'], axis=0)
        eattr_pad = jnp.pad(eattr, ((0, es['E_pad'] - es['E']), (0, 0)))

    # 4) conv stack (logits + segment softmax + residual + ELU fused in one kernel)
    for layer_id in range(num_layers):
        h = simple_hgn_conv(params['convs'][layer_id], h, es, eattr_pad,
                            num_nodes, num_heads, negative_slope,
                            apply_elu=(layer_id != num_layers - 1))
    # 5) output projection + split back per node type (to_hetero_feat)
    emb = linear(h, params['lin']['w'], params['lin']['b'])[:, :node_out_dim]
    # TODO(synk): optional L2 normalization of embeddings not implemented.
    return {nt: emb[offsets[nt]:offsets[nt] + counts[nt]] for nt in node_types}


# --------------------------------- main --------------------------------------

if __name__ == "__main__":
    key = jax.random.PRNGKey(0)
    (k_xu, k_xi, k_ea0, k_ea1, k_e0s, k_e0d, k_e1s, k_e1d,
     k_params) = jax.random.split(key, 9)

    N_user, N_item = 16, 16
    E0, E1 = 48, 48
    node_feat_dims = {'user': 12, 'item': 8}
    edge_feat_dims = {('user', 'to', 'item'): 6, ('item', 'rev', 'user'): 4}
    node_hid, edge_hid, edge_type_dim, node_out = 16, 8, 8, 128
    num_layers, num_heads = 2, 2

    x_dict = {
        'user': jax.random.normal(k_xu, (N_user, 12), jnp.float32),
        'item': jax.random.normal(k_xi, (N_item, 8), jnp.float32),
    }
    edge_index_dict = {
        ('user', 'to', 'item'): jnp.stack([
            jax.random.randint(k_e0s, (E0,), 0, N_user),
            jax.random.randint(k_e0d, (E0,), 0, N_item)]),
        ('item', 'rev', 'user'): jnp.stack([
            jax.random.randint(k_e1s, (E1,), 0, N_item),
            jax.random.randint(k_e1d, (E1,), 0, N_user)]),
    }
    edge_attr_dict = {
        ('user', 'to', 'item'): jax.random.normal(k_ea0, (E0, 6), jnp.float32),
        ('item', 'rev', 'user'): jax.random.normal(k_ea1, (E1, 4), jnp.float32),
    }

    params = init_simple_hgn_params(k_params, node_feat_dims, edge_feat_dims,
                                    node_hid, edge_hid, edge_type_dim, node_out,
                                    num_layers, num_heads)

    out = simple_hgn_forward(params, x_dict, edge_index_dict, edge_attr_dict,
                             num_heads, num_layers, node_out)
    out = jax.block_until_ready(out)

    assert out['user'].shape == (N_user, node_out)
    assert out['item'].shape == (N_item, node_out)
    assert all(bool(jnp.all(jnp.isfinite(v))) for v in out.values())
    print("KERNEL_OK")
</pallas_src>

<mosaic_0001>
module attributes {stable_mosaic.version = 11 : i64} {
  func.func @_linear_kernel(%arg0: i32, %arg1: i32, %arg2: i32, %arg3: memref<16x128xbf16, #tpu.memory_space<vmem>>, %arg4: memref<128x128xbf16, #tpu.memory_space<vmem>>, %arg5: memref<1x128xf32, #tpu.memory_space<vmem>>, %arg6: memref<16x128xf32, #tpu.memory_space<vmem>>, %arg7: memref<16x128xf32, #tpu.memory_space<vmem>>) attributes {dimension_semantics = [#tpu.dimension_semantics<parallel>, #tpu.dimension_semantics<parallel>, #tpu.dimension_semantics<arbitrary>], iteration_bounds = array<i64: 1, 1, 1>, scalar_prefetch = 0 : i64, scratch_operands = 1 : i64, tpu.core_type = #tpu.core_type<tc>, window_params = [{transform_indices = @transform_0, window_bounds = array<i64: 16, 128>}, {transform_indices = @transform_1, window_bounds = array<i64: 128, 128>}, {transform_indices = @transform_2, window_bounds = array<i64: 1, 128>}, {transform_indices = @transform_3, window_bounds = array<i64: 16, 128>}]} {
    %c0_i32 = arith.constant 0 : i32
    %0 = arith.cmpi eq, %arg2, %c0_i32 : i32
    %1 = arith.extui %0 : i1 to i32
    %c0_i32_0 = arith.constant 0 : i32
    %2 = arith.cmpi ne, %1, %c0_i32_0 : i32
    scf.if %2 {
      %cst_10 = arith.constant 0.000000e+00 : f32
      %12 = vector.broadcast %cst_10 : f32 to vector<16x128xf32>
      %c0_11 = arith.constant 0 : index
      %c0_12 = arith.constant 0 : index
      %13 = vector.load %arg7[%c0_11, %c0_12] : memref<16x128xf32, #tpu.memory_space<vmem>>, vector<16x128xf32>
      tpu.vector_store %arg7[%c0_11, %c0_12], %12 {strides = array<i32>} : memref<16x128xf32, #tpu.memory_space<vmem>>, vector<16x128xf32>,
    } else {
    }
    %c0 = arith.constant 0 : index
    %c0_1 = arith.constant 0 : index
    %3 = vector.load %arg7[%c0, %c0_1] : memref<16x128xf32, #tpu.memory_space<vmem>>, vector<16x128xf32>
    %c0_2 = arith.constant 0 : index
    %c0_3 = arith.constant 0 : index
    %4 = vector.load %arg3[%c0_2, %c0_3] : memref<16x128xbf16, #tpu.memory_space<vmem>>, vector<16x128xbf16>
    %c0_4 = arith.constant 0 : index
    %c0_5 = arith.constant 0 : index
    %5 = vector.load %arg4[%c0_4, %c0_5] : memref<128x128xbf16, #tpu.memory_space<vmem>>, vector<128x128xbf16>
    %cst = arith.constant dense<0.000000e+00> : vector<16x128xf32>
    %6 = tpu.matmul %4, %5, %cst {dimension_numbers = #tpu.dot_dimension_numbers<[1], [0], [0], [1], [0, 0, 1, 1], [], []>} : vector<16x128xbf16>, vector<128x128xbf16>, vector<16x128xf32> -> vector<16x128xf32>
    %7 = arith.addf %3, %6 : vector<16x128xf32>
    %c0_6 = arith.constant 0 : index
    %c0_7 = arith.constant 0 : index
    %8 = vector.load %arg7[%c0_6, %c0_7] : memref<16x128xf32, #tpu.memory_space<vmem>>, vector<16x128xf32>
    tpu.vector_store %arg7[%c0_6, %c0_7], %7 {strides = array<i32>} : memref<16x128xf32, #tpu.memory_space<vmem>>, vector<16x128xf32>,
    %c0_i32_8 = arith.constant 0 : i32
    %9 = arith.cmpi eq, %arg2, %c0_i32_8 : i32
    %10 = arith.extui %9 : i1 to i32
    %c0_i32_9 = arith.constant 0 : i32
    %11 = arith.cmpi ne, %10, %c0_i32_9 : i32
    scf.if %11 {
      %c0_10 = arith.constant 0 : index
      %c0_11 = arith.constant 0 : index
      %12 = vector.load %arg7[%c0_10, %c0_11] : memref<16x128xf32, #tpu.memory_space<vmem>>, vector<16x128xf32>
      %c0_12 = arith.constant 0 : index
      %c0_13 = arith.constant 0 : index
      %13 = vector.load %arg5[%c0_12, %c0_13] : memref<1x128xf32, #tpu.memory_space<vmem>>, vector<1x128xf32>
      %14 = vector.broadcast %13 : vector<1x128xf32> to vector<16x128xf32>
      %15 = arith.addf %12, %14 : vector<16x128xf32>
      %c0_14 = arith.constant 0 : index
      %c0_15 = arith.constant 0 : index
      %16 = vector.load %arg6[%c0_14, %c0_15] : memref<16x128xf32, #tpu.memory_space<vmem>>, vector<16x128xf32>
      tpu.vector_store %arg6[%c0_14, %c0_15], %15 {strides = array<i32>} : memref<16x128xf32, #tpu.memory_space<vmem>>, vector<16x128xf32>,
    } else {
    }
    return
  }
  func.func @transform_0(%arg0: i32, %arg1: i32, %arg2: i32) -> (i32, i32) {
    %c0_i32 = arith.constant 0 : i32
    return %arg0, %arg2 : i32, i32
  }
  func.func @transform_1(%arg0: i32, %arg1: i32, %arg2: i32) -> (i32, i32) {
    %c0_i32 = arith.constant 0 : i32
    return %arg2, %arg1 : i32, i32
  }
  func.func @transform_2(%arg0: i32, %arg1: i32, %arg2: i32) -> (i32, i32) {
    %c0_i32 = arith.constant 0 : i32
    %c0_i32_0 = arith.constant 0 : i32
    return %c0_i32, %arg1 : i32, i32
  }
  func.func @transform_3(%arg0: i32, %arg1: i32, %arg2: i32) -> (i32, i32) {
    %c0_i32 = arith.constant 0 : i32
    return %arg0, %arg1 : i32, i32
  }
}

</mosaic_0001>

<llo_original>
// kernel: tpu_custom_call.1
$region0: #{tpu_custom_call.1}
  #allocation0 [shape = 'u32[]', space=smem, size = 0x4, offset = 0x4, fixed_abs, tag = 'smem constant byte address 0x4 - core index']
  #allocation1 [shape = 'u32[72,128]{1,0:T(1,128)}', space=vmem, size = 0x9000, scoped, tag = 'internal scratch']
  #allocation2 [shape = 'f32[16,128]{1,0:T(8,128)}', space=vmem, size = 0x2000, scoped, tag = 'scratch operand']
  %s0 = inlined_call_operand.hbm [shape: bf16[16,128], index: 0, kind: input, shape index: {}]
  %s1 = inlined_call_operand.hbm [shape: bf16[128,128], index: 1, kind: input, shape index: {}]
  %s2 = inlined_call_operand.vmem [shape: f32[1,128], index: 2, kind: input, shape index: {}]
  %s3 = inlined_call_operand.hbm [shape: f32[16,128], index: 3, kind: output, shape index: {}]
  %s4 = sld [smem:[#allocation0]]
  $region38: #{tpu_custom_call.1} parent=0
    _
  %s6 = ssub.s32 1, %s4
  %s7 = scalar_select 0, %s6, %s4
  $region1: #{tpu_custom_call.1} parent=0
    #allocation3 [shape = 'u8[4096]{0}', space=vmem, size = 0x1000, scoped, tag = 'input window, operand 0, single buffered']
    #allocation4 [shape = 's32[1]{0}', space=sflag, size = 0x4, scoped, tag = 'scoped memory for tpu_custom_call.1']
    #allocation5 [shape = 's32[1]{0}', space=sflag, size = 0x4, scoped, tag = 'scoped memory for tpu_custom_call.1']
    #allocation6 [shape = 'u8[32768]{0}', space=vmem, size = 0x8000, scoped, tag = 'input window, operand 1, single buffered']
    #allocation7 [shape = 's32[1]{0}', space=sflag, size = 0x4, scoped, tag = 'scoped memory for tpu_custom_call.1']
    #allocation8 [shape = 'u8[8192]{0}', space=vmem, size = 0x2000, scoped, tag = 'output window, operand 0, single buffered']
    %8 = vsyncpa [#allocation4], 0
    %9 = vsyncpa [#allocation7], 0
    %10 = vsyncpa [#allocation5], 0
    // Predicated region
    $region2: #{tpu_custom_call.1} parent=1 // pred_check
      _
    $region3: #{tpu_custom_call.1} parent=1 // pred_check_branch
      %12 = sbr.rel (0) target = $region5
    $region4: #{tpu_custom_call.1} parent=1 // pred_region
      %14 = vsyncadd [#allocation4], 0
      %s15 = sshll.u32 %s0, 4
      %s16 = int_to_ptr.hbm [resolvable:$true] %s15
      %s17 = sshll.u32 [#allocation3], 4
      %s18 = int_to_ptr.vmem [resolvable:$true] %s17
      %23 = dma.hbm_to_vmem [thread:$0]  %s16, 128, %s18, [#allocation4], 64, 64, 4
    $region5: #{tpu_custom_call.1} parent=1 // pred_fallthru
      _
    // Predicated region
    $region6: #{tpu_custom_call.1} parent=1 // pred_check
      _
    $region7: #{tpu_custom_call.1} parent=1 // pred_check_branch
      %25 = sbr.rel (0) target = $region9
    $region8: #{tpu_custom_call.1} parent=1 // pred_region
      %27 = vsyncadd [#allocation7], 0
      %s28 = sshll.u32 %s1, 4
      %s29 = int_to_ptr.hbm [resolvable:$true] %s28
      %s30 = sshll.u32 [#allocation6], 4
      %s31 = int_to_ptr.vmem [resolvable:$true] %s30
      %36 = dma.hbm_to_vmem [thread:$0]  %s29, 1024, %s31, [#allocation7], 64, 64, 4
    $region9: #{tpu_custom_call.1} parent=1 // pred_fallthru
      _
    // Predicated region
    $region10: #{tpu_custom_call.1} parent=1 // pred_check
      _
    $region11: #{tpu_custom_call.1} parent=1 // pred_check_branch
      %38 = sbr.rel (0) target = $region13
    $region12: #{tpu_custom_call.1} parent=1 // pred_region
      _
    $region13: #{tpu_custom_call.1} parent=1 // pred_fallthru
      _
    // Predicated region
    $region14: #{tpu_custom_call.1} parent=1 // pred_check
      _
    $region15: #{tpu_custom_call.1} parent=1 // pred_check_branch
      %40 = sbr.rel (0) target = $region17
    $region16: #{tpu_custom_call.1} parent=1 // pred_region
      %42 = dma.done [#allocation4], 128
    $region17: #{tpu_custom_call.1} parent=1 // pred_fallthru
      _
    // Predicated region
    $region18: #{tpu_custom_call.1} parent=1 // pred_check
      _
    $region19: #{tpu_custom_call.1} parent=1 // pred_check_branch
      %44 = sbr.rel (0) target = $region21
    $region20: #{tpu_custom_call.1} parent=1 // pred_region
      %46 = dma.done [#allocation7], 1024
    $region21: #{tpu_custom_call.1} parent=1 // pred_fallthru
      _
    %p47 = scmp.eq.s32.totalorder 0, 0
    // Predicated region
    $region22: #{tpu_custom_call.1} parent=1 // pred_check
      %p48 = pneg %p47
    $region23: #{tpu_custom_call.1} parent=1 // pred_check_branch
      %50 = sbr.rel (%p48) target = $region25
    $region24: #{tpu_custom_call.1} parent=1 // pred_region
      %51 = vst [vmem:[#allocation2] sm:$0xff] 0.0
      %52 = vst [vmem:[#allocation2 + $0x8] sm:$0xff] 0.0
    $region25: #{tpu_custom_call.1} parent=1 // pred_fallthru
      _
    %v53 = vld [vmem:[#allocation2] sm:$0xff]
    %v54 = vld [vmem:[#allocation2 + $0x8] sm:$0xff]
    %v55 = vld [vmem:[#allocation3] sm:$0xf]
    %v56 = vld [vmem:[#allocation3 + $0x4] sm:$0xf]
    %v57 = vld [vmem:[#allocation6] sm:$0xf]
    %v58 = vld [vmem:[#allocation6 + $0x4] sm:$0xf]
    %v59 = vld [vmem:[#allocation6 + $0x8] sm:$0xf]
    %v60 = vld [vmem:[#allocation6 + $0xc] sm:$0xf]
    %v61 = vld [vmem:[#allocation6 + $0x10] sm:$0xf]
    %v62 = vld [vmem:[#allocation6 + $0x14] sm:$0xf]
    %v63 = vld [vmem:[#allocation6 + $0x18] sm:$0xf]
    %v64 = vld [vmem:[#allocation6 + $0x1c] sm:$0xf]
    %v65 = vld [vmem:[#allocation6 + $0x20] sm:$0xf]
    %v66 = vld [vmem:[#allocation6 + $0x24] sm:$0xf]
    %v67 = vld [vmem:[#allocation6 + $0x28] sm:$0xf]
    %v68 = vld [vmem:[#allocation6 + $0x2c] sm:$0xf]
    %v69 = vld [vmem:[#allocation6 + $0x30] sm:$0xf]
    %v70 = vld [vmem:[#allocation6 + $0x34] sm:$0xf]
    %v71 = vld [vmem:[#allocation6 + $0x38] sm:$0xf]
    %v72 = vld [vmem:[#allocation6 + $0x3c] sm:$0xf]
    %v75 = vunpack.c.l.b16 %v55
    %v76 = vunpack.c.l.b16 %v56
    %v77 = vpack.c.b16 %v76, %v75
    %v95 = vunpack.c.l.b16 %v57
    %v96 = vunpack.c.l.b16 %v58
    %v97 = vunpack.c.l.b16 %v59
    %v98 = vunpack.c.l.b16 %v60
    %v99 = vunpack.c.l.b16 %v61
    %v100 = vunpack.c.l.b16 %v62
    %v101 = vunpack.c.l.b16 %v63
    %v102 = vunpack.c.l.b16 %v64
    %v103 = vunpack.c.l.b16 %v65
    %v104 = vunpack.c.l.b16 %v66
    %v105 = vunpack.c.l.b16 %v67
    %v106 = vunpack.c.l.b16 %v68
    %v107 = vunpack.c.l.b16 %v69
    %v108 = vunpack.c.l.b16 %v70
    %v109 = vunpack.c.l.b16 %v71
    %v110 = vunpack.c.l.b16 %v72
    %v111 = vpack.c.b16 %v96, %v95
    %v112 = vpack.c.b16 %v98, %v97
    %v113 = vpack.c.b16 %v100, %v99
    %v114 = vpack.c.b16 %v102, %v101
    %v115 = vpack.c.b16 %v104, %v103
    %v116 = vpack.c.b16 %v106, %v105
    %v117 = vpack.c.b16 %v108, %v107
    %v118 = vpack.c.b16 %v110, %v109
    %127 = vmatpush.bf16.msra.mxu0 %v118
    %128 = vmatpush.bf16.msra.mxu0 %v117
    %129 = vmatpush.bf16.msra.mxu0 %v116
    %130 = vmatpush.bf16.msra.mxu0 %v115
    %131 = vmatpush.bf16.msra.mxu0 %v114
    %132 = vmatpush.bf16.msra.mxu0 %v113
    %133 = vmatpush.bf16.msra.mxu0 %v112
    %134 = vmatpush.bf16.msra.mxu0 %v111
    %135 = vmatmul.bf16.gmra.mxu0 %v77
    %v136 = vpop.f32.mrf.mxu0
    %v137 = vadd.f32 0.0, %v136
    %v138 = vpop.f32.mrf.mxu0
    %v139 = vadd.f32 0.0, %v138
    %140 = vdwg.mxu0
    %v141 = vadd.f32 %v53, %v137
    %v142 = vadd.f32 %v54, %v139
    %143 = vst [vmem:[#allocation2] sm:$0xff] %v141
    %144 = vst [vmem:[#allocation2 + $0x8] sm:$0xff] %v142
    // Predicated region
    $region26: #{tpu_custom_call.1} parent=1 // pred_check
      %p145 = pneg %p47
    $region27: #{tpu_custom_call.1} parent=1 // pred_check_branch
      %147 = sbr.rel (%p145) target = $region29
    $region28: #{tpu_custom_call.1} parent=1 // pred_region
      %v148 = vld [vmem:[#allocation2] sm:$0xff]
      %v149 = vld [vmem:[#allocation2 + $0x8] sm:$0xff]
      %v150 = vld [vmem:[%s2] sm:$0x1]
      %v152 = vperm.slane %v150, 0
      %v154 = vadd.f32 %v148, %v152
      %v155 = vadd.f32 %v149, %v152
      %156 = vst [vmem:[#allocation8] sm:$0xff] %v154
      %157 = vst [vmem:[#allocation8 + $0x8] sm:$0xff] %v155
    $region29: #{tpu_custom_call.1} parent=1 // pred_fallthru
      _
    // Predicated region
    $region30: #{tpu_custom_call.1} parent=1 // pred_check
      _
    $region31: #{tpu_custom_call.1} parent=1 // pred_check_branch
      %159 = sbr.rel (0) target = $region33
    $region32: #{tpu_custom_call.1} parent=1 // pred_region
      %161 = vsyncadd [#allocation5], 0
      %s162 = sshll.u32 [#allocation8], 4
      %s163 = int_to_ptr.vmem [resolvable:$true] %s162
      %s164 = sshll.u32 %s3, 4
      %s165 = int_to_ptr.hbm [resolvable:$true] %s164
      %170 = dma.vmem_to_hbm [thread:$0]  %s163, 256, %s165, [#allocation5], 128, 128, 8
    $region33: #{tpu_custom_call.1} parent=1 // pred_fallthru
      _
    // Predicated region
    $region34: #{tpu_custom_call.1} parent=1 // pred_check
      _
    $region35: #{tpu_custom_call.1} parent=1 // pred_check_branch
      %172 = sbr.rel (0) target = $region37
    $region36: #{tpu_custom_call.1} parent=1 // pred_region
      %174 = dma.done [#allocation5], 256
    $region37: #{tpu_custom_call.1} parent=1 // pred_fallthru
      _
    %175 = vsyncpa [#allocation4], 1
    %176 = vsyncpa [#allocation7], 1
    %177 = vsyncpa [#allocation5], 1

</llo_original>
